<compile_context>
chip_gen: v7x
topology: tpu7x:2x2x1
jax: 0.10.0
libtpu: 0.0.40
codegen_flags: <defaults>
</compile_context>

<pallas_src>
import functools

import jax
import jax.numpy as jnp
from jax import lax
from jax.experimental import pallas as pl
from jax.experimental.pallas import tpu as pltpu

_LANE = 128


# ----------------------------- fused kernel ---------------------------------
def _fused_kernel(x_ref, w1s_ref, b1_ref, w2_ref, b2_ref, w3_ref, b3_ref,
                  o_ref, acc_ref, gflat_ref, *,
                  channels, hw_total, tile_k, ragged, compute_dtype):
    k = pl.program_id(1)

    # Partial Gram for this HW tile: native-dtype load, in-kernel cast (the VPU
    # convert hides under the DMA-bound pipeline).
    xb = x_ref[...].astype(compute_dtype)                      # (Bt, C, tk)
    if ragged:
        # Zero out-of-range lanes of the last (partial) HW tile.
        col = lax.broadcasted_iota(jnp.int32, xb.shape, dimension=2)
        valid = (k * tile_k + col) < hw_total
        xb = jnp.where(valid, xb, jnp.zeros_like(xb))
    partial = jnp.einsum("bcs,bds->bcd", xb, xb,
                         preferred_element_type=jnp.float32)   # (Bt, C, C) f32

    @pl.when(k == 0)
    def _first():
        acc_ref[...] = partial          # write directly, no zero-fill + add

    @pl.when(k > 0)
    def _accumulate():
        acc_ref[...] += partial

    # MLP epilogue on the final reduction step.
    @pl.when(k == pl.num_programs(1) - 1)
    def _finalize():
        # Flatten (Bt, C, C) -> (Bt, C*C) with static slice-stores (one-time
        # cost per batch block; avoids an in-kernel reshape of tiled dims).
        for i in range(channels):
            gflat_ref[:, i * channels:(i + 1) * channels] = acc_ref[:, i, :]
        g = gflat_ref[...].astype(compute_dtype)               # (Bt, C*C)

        # Layer 1: one matmul against the triu-scattered flattened weight
        # (diagonal / lower-triangle weight rows are zero -> exact triu select).
        h = jnp.dot(g, w1s_ref[...],
                    preferred_element_type=jnp.float32) + b1_ref[...]
        h = jnp.where(h > 0, h, 0.2 * h)                       # LeakyReLU(0.2)
        h = jnp.dot(h, w2_ref[...],
                    preferred_element_type=jnp.float32) + b2_ref[...]
        h = jnp.where(h > 0, h, 0.2 * h)
        o_ref[...] = (jnp.dot(h, w3_ref[...],
                              preferred_element_type=jnp.float32)
                      + b3_ref[...]).astype(o_ref.dtype)


# ------------------------------ helpers --------------------------------------
def _vmem_budget_bytes():
    cap = 64 * 1024 * 1024
    try:
        info = pltpu.get_tpu_info()
        cap = int(getattr(info, "vmem_capacity_bytes", cap))
    except Exception:
        pass
    # v5e/v6e (128 MiB physical) -> ~96 MiB scoped; v7x (64 MiB) -> 48 MiB.
    return int(min(96 * 1024 * 1024, (cap * 3) // 4))


def _round_down(v, m):
    return (v // m) * m


def prepare_params(params, channels, compute_dtype=jnp.bfloat16):
    """Fold the strictly-upper-triangular Gram selection into W1 and flatten it
    to (C*C, H1) in the MXU compute dtype.  Call ONCE per parameter set and
    reuse the result (hoists the scatter out of the per-call hot path).
    Use compute_dtype=jnp.float32 for strict f32 parity."""
    w1, b1, w2, b2, w3, b3 = params
    C = channels
    input_dim, H1 = w1.shape
    assert input_dim == C * (C - 1) // 2, "W1 rows must equal triu(C, k=1) size"
    iu0, iu1 = jnp.triu_indices(C, k=1)
    w1s = jnp.zeros((C, C, H1), jnp.float32).at[iu0, iu1, :].set(
        w1.astype(jnp.float32))
    w1s = w1s.reshape(C * C, H1).astype(compute_dtype)
    return (w1s, b1.astype(jnp.float32), w2.astype(jnp.float32),
            b2.astype(jnp.float32), w3.astype(jnp.float32),
            b3.astype(jnp.float32))


# ------------------------------ wrapper --------------------------------------
def fog_pass_filter(x, prepared_params, *, target_step_bytes=2 * 1024 * 1024):
    """x: (B, C, H, W) -> fog factors (B, output_dim); matches the PyTorch module.
    `prepared_params` comes from prepare_params(...)."""
    w1s, b1, w2, b2, w3, b3 = prepared_params
    B, C, H, W = x.shape
    HW = H * W
    assert w1s.shape[0] == C * C, "prepared W1 does not match channel count"
    H1 = w1s.shape[1]
    H2 = w2.shape[1]
    out_dim = w3.shape[1]
    compute_dtype = w1s.dtype

    x_flat = x.reshape(B, C, HW)            # native dtype; cast happens in-kernel

    # ---- generation-aware VMEM budgeting ------------------------------------
    budget = _vmem_budget_bytes()
    ebytes = x_flat.dtype.itemsize
    cd_bytes = jnp.dtype(compute_dtype).itemsize
    weight_bytes = (C * C * H1 * cd_bytes + H1 * H2 * 4 + H2 * out_dim * 4
                    + (H1 + H2 + out_dim) * 4)
    # Weights counted double-buffered (conservative); 2 MiB slack for scratch.
    # NOTE: for very large C the resident scattered W1 would need H1 tiling.
    remaining = max(budget - 2 * weight_bytes - 2 * 1024 * 1024,
                    4 * 1024 * 1024)
    n_buf = 2                                # x double-buffering

    # ---- HW (reduction) tile -------------------------------------------------
    max_tk = max(_LANE, _round_down(remaining // (n_buf * C * ebytes), _LANE))
    if HW <= max_tk:
        tk = HW                              # single reduction step, no ragged tail
    else:
        tk = min(max_tk,
                 max(_LANE, _round_down(8 * 1024 * 1024 // (C * ebytes), _LANE)))
        # Prefer a lane-aligned tk that divides HW exactly (avoid ragged tail).
        for cand in range(tk, max(_LANE, tk // 2) - 1, -_LANE):
            if HW % cand == 0:
                tk = cand
                break
    num_k = pl.cdiv(HW, tk)
    ragged = (HW % tk) != 0

    # ---- batch blocking (amortise per-step overhead when C*tk is small) -----
    step_bytes = C * tk * ebytes
    bt_cap = min(B,
                 max(1, target_step_bytes // step_bytes),
                 max(1, remaining // (n_buf * step_bytes)))
    bt = 1
    for d in range(int(bt_cap), 0, -1):      # largest divisor of B <= cap
        if B % d == 0:
            bt = d
            break

    kernel = functools.partial(
        _fused_kernel, channels=C, hw_total=HW, tile_k=tk, ragged=ragged,
        compute_dtype=compute_dtype)

    return pl.pallas_call(
        kernel,
        out_shape=jax.ShapeDtypeStruct((B, out_dim), jnp.float32),
        grid_spec=pltpu.PrefetchScalarGridSpec(
            num_scalar_prefetch=0,
            grid=(B // bt, num_k),                               # reduction last
            in_specs=[
                pl.BlockSpec((bt, C, tk), lambda b, k: (b, 0, k)),   # x streamed
                pl.BlockSpec((C * C, H1), lambda b, k: (0, 0)),      # resident W1s
                pl.BlockSpec((1, H1), lambda b, k: (0, 0)),
                pl.BlockSpec((H1, H2), lambda b, k: (0, 0)),
                pl.BlockSpec((1, H2), lambda b, k: (0, 0)),
                pl.BlockSpec((H2, out_dim), lambda b, k: (0, 0)),
                pl.BlockSpec((1, out_dim), lambda b, k: (0, 0)),
            ],
            out_specs=pl.BlockSpec((bt, out_dim), lambda b, k: (b, 0)),
            scratch_shapes=[
                pltpu.VMEM((bt, C, C), jnp.float32),      # Gram accumulator
                pltpu.VMEM((bt, C * C), jnp.float32),     # flattened Gram
            ],
        ),
        compiler_params=pltpu.CompilerParams(
            dimension_semantics=("parallel", "arbitrary"),
            vmem_limit_bytes=budget,
        ),
    )(x_flat, w1s, b1, w2, b2, w3, b3)


# ------------------------------ params / reference ---------------------------
def init_params(key, input_dim, hidden_dim1=256, hidden_dim2=128, output_dim=128):
    """Deterministic init mirroring nn.Linear default (uniform +-1/sqrt(fan_in)).
    Weights stored as (in, out) so the kernel computes x @ W."""
    ks = jax.random.split(key, 6)

    def lin(kw, kb, fan_in, fan_out):
        bound = 1.0 / jnp.sqrt(jnp.float32(fan_in))
        w = jax.random.uniform(kw, (fan_in, fan_out), jnp.float32, -bound, bound)
        b = jax.random.uniform(kb, (1, fan_out), jnp.float32, -bound, bound)
        return w, b

    w1, b1 = lin(ks[0], ks[1], input_dim, hidden_dim1)
    w2, b2 = lin(ks[2], ks[3], hidden_dim1, hidden_dim2)
    w3, b3 = lin(ks[4], ks[5], hidden_dim2, output_dim)
    return (w1, b1, w2, b2, w3, b3)


def _reference(x, params, compute_dtype=jnp.bfloat16):
    """Pure-JAX reference mirroring the kernel's mixed-precision choices
    (compute_dtype MXU inputs, f32 accumulation)."""
    w1, b1, w2, b2, w3, b3 = params
    B, C, H, W = x.shape
    xf = x.reshape(B, C, H * W).astype(compute_dtype)
    gram = jnp.einsum("bcs,bds->bcd", xf, xf, preferred_element_type=jnp.float32)
    iu0, iu1 = jnp.triu_indices(C, k=1)
    gf = gram[:, iu0, iu1].astype(compute_dtype)
    h = jnp.dot(gf, w1.astype(compute_dtype),
                preferred_element_type=jnp.float32) + b1
    h = jnp.where(h > 0, h, 0.2 * h)
    h = jnp.dot(h, w2, preferred_element_type=jnp.float32) + b2
    h = jnp.where(h > 0, h, 0.2 * h)
    return jnp.dot(h, w3, preferred_element_type=jnp.float32) + b3


if __name__ == "__main__":
    key = jax.random.PRNGKey(0)
    kx, kp = jax.random.split(key)

    B, C, H, W = 2, 4, 16, 16
    input_dim = C * (C - 1) // 2   # 6

    x = jax.random.normal(kx, (B, C, H, W), dtype=jnp.float32)
    params = init_params(kp, input_dim)

    # Weight prep (triu-fold + flatten) hoisted out of the hot path; reuse the
    # prepared params across calls.
    prepared = prepare_params(params, C, compute_dtype=jnp.bfloat16)

    out = fog_pass_filter(x, prepared)
    out = jax.block_until_ready(out)

    ref = _reference(x, params, compute_dtype=jnp.bfloat16)
    assert out.shape == (B, 128), out.shape
    assert jnp.allclose(out, ref, rtol=2e-3, atol=2e-3), \
        float(jnp.max(jnp.abs(out - ref)))

    print("KERNEL_OK")
</pallas_src>

<mosaic_0001>
module attributes {stable_mosaic.version = 11 : i64} {
  func.func @_fused_kernel(%arg0: i32, %arg1: i32, %arg2: memref<2x4x256xf32, #tpu.memory_space<vmem>>, %arg3: memref<16x256xbf16, #tpu.memory_space<vmem>>, %arg4: memref<1x256xf32, #tpu.memory_space<vmem>>, %arg5: memref<256x128xf32, #tpu.memory_space<vmem>>, %arg6: memref<1x128xf32, #tpu.memory_space<vmem>>, %arg7: memref<128x128xf32, #tpu.memory_space<vmem>>, %arg8: memref<1x128xf32, #tpu.memory_space<vmem>>, %arg9: memref<2x128xf32, #tpu.memory_space<vmem>>, %arg10: memref<2x4x4xf32, #tpu.memory_space<vmem>>, %arg11: memref<2x16xf32, #tpu.memory_space<vmem>>) attributes {dimension_semantics = [#tpu.dimension_semantics<parallel>, #tpu.dimension_semantics<arbitrary>], iteration_bounds = array<i64: 1, 1>, scalar_prefetch = 0 : i64, scratch_operands = 2 : i64, tpu.core_type = #tpu.core_type<tc>, window_params = [{transform_indices = @transform_0, window_bounds = array<i64: 2, 4, 256>}, {pipeline_mode = #tpu.pipeline_mode<synchronous>, transform_indices = @transform_1, window_bounds = array<i64: 16, 256>}, {pipeline_mode = #tpu.pipeline_mode<synchronous>, transform_indices = @transform_2, window_bounds = array<i64: 1, 256>}, {pipeline_mode = #tpu.pipeline_mode<synchronous>, transform_indices = @transform_3, window_bounds = array<i64: 256, 128>}, {pipeline_mode = #tpu.pipeline_mode<synchronous>, transform_indices = @transform_4, window_bounds = array<i64: 1, 128>}, {pipeline_mode = #tpu.pipeline_mode<synchronous>, transform_indices = @transform_5, window_bounds = array<i64: 128, 128>}, {pipeline_mode = #tpu.pipeline_mode<synchronous>, transform_indices = @transform_6, window_bounds = array<i64: 1, 128>}, {transform_indices = @transform_7, window_bounds = array<i64: 2, 128>}]} {
    %c0 = arith.constant 0 : index
    %c0_0 = arith.constant 0 : index
    %c0_1 = arith.constant 0 : index
    %0 = vector.load %arg2[%c0, %c0_0, %c0_1] : memref<2x4x256xf32, #tpu.memory_space<vmem>>, vector<2x4x256xf32>
    %1 = arith.truncf %0 : vector<2x4x256xf32> to vector<2x4x256xbf16>
    "tpu.trace_start"() <{level = 10 : i32, message = "bcs,bds->bcd"}> : () -> ()
    %cst = arith.constant dense<0.000000e+00> : vector<2x4x4xf32>
    %2 = tpu.matmul %1, %1, %cst {dimension_numbers = #tpu.dot_dimension_numbers<[2], [2], [1], [1], [0, 0, 0, 1, 1, 1], [0], [0]>} : vector<2x4x256xbf16>, vector<2x4x256xbf16>, vector<2x4x4xf32> -> vector<2x4x4xf32>
    %c0_i32 = arith.constant 0 : i32
    "tpu.trace_stop"() : () -> ()
    %3 = arith.cmpi eq, %arg1, %c0_i32 : i32
    %4 = arith.extui %3 : i1 to i32
    %c0_i32_2 = arith.constant 0 : i32
    %5 = arith.cmpi ne, %4, %c0_i32_2 : i32
    scf.if %5 {
      %c0_7 = arith.constant 0 : index
      %c0_8 = arith.constant 0 : index
      %c0_9 = arith.constant 0 : index
      %12 = vector.load %arg10[%c0_7, %c0_8, %c0_9] : memref<2x4x4xf32, #tpu.memory_space<vmem>>, vector<2x4x4xf32>
      tpu.vector_store %arg10[%c0_7, %c0_8, %c0_9], %2 {strides = array<i32>} : memref<2x4x4xf32, #tpu.memory_space<vmem>>, vector<2x4x4xf32>,
    } else {
    }
    %c0_i32_3 = arith.constant 0 : i32
    %6 = arith.cmpi sgt, %arg1, %c0_i32_3 : i32
    %7 = arith.extui %6 : i1 to i32
    %c0_i32_4 = arith.constant 0 : i32
    %8 = arith.cmpi ne, %7, %c0_i32_4 : i32
    scf.if %8 {
      %c0_7 = arith.constant 0 : index
      %c0_8 = arith.constant 0 : index
      %c0_9 = arith.constant 0 : index
      %12 = vector.load %arg10[%c0_7, %c0_8, %c0_9] : memref<2x4x4xf32, #tpu.memory_space<vmem>>, vector<2x4x4xf32>
      %13 = arith.addf %12, %2 : vector<2x4x4xf32>
      %c0_10 = arith.constant 0 : index
      %c0_11 = arith.constant 0 : index
      %c0_12 = arith.constant 0 : index
      %14 = vector.load %arg10[%c0_10, %c0_11, %c0_12] : memref<2x4x4xf32, #tpu.memory_space<vmem>>, vector<2x4x4xf32>
      tpu.vector_store %arg10[%c0_10, %c0_11, %c0_12], %13 {strides = array<i32>} : memref<2x4x4xf32, #tpu.memory_space<vmem>>, vector<2x4x4xf32>,
    } else {
    }
    %c0_i32_5 = arith.constant 0 : i32
    %9 = arith.cmpi eq, %arg1, %c0_i32_5 : i32
    %10 = arith.extui %9 : i1 to i32
    %c0_i32_6 = arith.constant 0 : i32
    %11 = arith.cmpi ne, %10, %c0_i32_6 : i32
    scf.if %11 {
      %c0_7 = arith.constant 0 : index
      %c0_8 = arith.constant 0 : index
      %c0_9 = arith.constant 0 : index
      %12 = vector.load %arg10[%c0_7, %c0_8, %c0_9] : memref<2x4x4xf32, #tpu.memory_space<vmem>>, vector<2x1x4xf32>
      %13 = vector.shape_cast %12 : vector<2x1x4xf32> to vector<2x4xf32>
      %c0_10 = arith.constant 0 : index
      %c0_11 = arith.constant 0 : index
      %14 = vector.load %arg11[%c0_10, %c0_11] : memref<2x16xf32, #tpu.memory_space<vmem>>, vector<2x4xf32>
      tpu.vector_store %arg11[%c0_10, %c0_11], %13 {strides = array<i32>} : memref<2x16xf32, #tpu.memory_space<vmem>>, vector<2x4xf32>,
      %c0_12 = arith.constant 0 : index
      %c1 = arith.constant 1 : index
      %c0_13 = arith.constant 0 : index
      %15 = vector.load %arg10[%c0_12, %c1, %c0_13] : memref<2x4x4xf32, #tpu.memory_space<vmem>>, vector<2x1x4xf32>
      %16 = vector.shape_cast %15 : vector<2x1x4xf32> to vector<2x4xf32>
      %c0_14 = arith.constant 0 : index
      %c4 = arith.constant 4 : index
      %17 = vector.load %arg11[%c0_14, %c4] : memref<2x16xf32, #tpu.memory_space<vmem>>, vector<2x4xf32>
      tpu.vector_store %arg11[%c0_14, %c4], %16 {strides = array<i32>} : memref<2x16xf32, #tpu.memory_space<vmem>>, vector<2x4xf32>,
      %c0_15 = arith.constant 0 : index
      %c2 = arith.constant 2 : index
      %c0_16 = arith.constant 0 : index
      %18 = vector.load %arg10[%c0_15, %c2, %c0_16] : memref<2x4x4xf32, #tpu.memory_space<vmem>>, vector<2x1x4xf32>
      %19 = vector.shape_cast %18 : vector<2x1x4xf32> to vector<2x4xf32>
      %c0_17 = arith.constant 0 : index
      %c8 = arith.constant 8 : index
      %20 = vector.load %arg11[%c0_17, %c8] : memref<2x16xf32, #tpu.memory_space<vmem>>, vector<2x4xf32>
      tpu.vector_store %arg11[%c0_17, %c8], %19 {strides = array<i32>} : memref<2x16xf32, #tpu.memory_space<vmem>>, vector<2x4xf32>,
      %c0_18 = arith.constant 0 : index
      %c3 = arith.constant 3 : index
      %c0_19 = arith.constant 0 : index
      %21 = vector.load %arg10[%c0_18, %c3, %c0_19] : memref<2x4x4xf32, #tpu.memory_space<vmem>>, vector<2x1x4xf32>
      %22 = vector.shape_cast %21 : vector<2x1x4xf32> to vector<2x4xf32>
      %c0_20 = arith.constant 0 : index
      %c12 = arith.constant 12 : index
      %23 = vector.load %arg11[%c0_20, %c12] : memref<2x16xf32, #tpu.memory_space<vmem>>, vector<2x4xf32>
      tpu.vector_store %arg11[%c0_20, %c12], %22 {strides = array<i32>} : memref<2x16xf32, #tpu.memory_space<vmem>>, vector<2x4xf32>,
      %c0_21 = arith.constant 0 : index
      %c0_22 = arith.constant 0 : index
      %24 = vector.load %arg11[%c0_21, %c0_22] : memref<2x16xf32, #tpu.memory_space<vmem>>, vector<2x16xf32>
      %25 = arith.truncf %24 : vector<2x16xf32> to vector<2x16xbf16>
      %c0_23 = arith.constant 0 : index
      %c0_24 = arith.constant 0 : index
      %26 = vector.load %arg3[%c0_23, %c0_24] : memref<16x256xbf16, #tpu.memory_space<vmem>>, vector<16x256xbf16>
      %cst_25 = arith.constant dense<0.000000e+00> : vector<2x256xf32>
      %27 = tpu.matmul %25, %26, %cst_25 {dimension_numbers = #tpu.dot_dimension_numbers<[1], [0], [0], [1], [0, 0, 1, 1], [], []>} : vector<2x16xbf16>, vector<16x256xbf16>, vector<2x256xf32> -> vector<2x256xf32>
      %c0_26 = arith.constant 0 : index
      %c0_27 = arith.constant 0 : index
      %28 = vector.load %arg4[%c0_26, %c0_27] : memref<1x256xf32, #tpu.memory_space<vmem>>, vector<1x256xf32>
      %29 = vector.broadcast %28 : vector<1x256xf32> to vector<2x256xf32>
      %30 = arith.addf %27, %29 : vector<2x256xf32>
      %cst_28 = arith.constant 0.000000e+00 : f32
      %31 = vector.broadcast %cst_28 : f32 to vector<2x256xf32>
      %32 = arith.cmpf ogt, %30, %31 : vector<2x256xf32>
      %cst_29 = arith.constant 2.000000e-01 : f32
      %33 = vector.broadcast %cst_29 : f32 to vector<2x256xf32>
      %34 = arith.mulf %33, %30 : vector<2x256xf32>
      %35 = arith.select %32, %30, %34 : vector<2x256xi1>, vector<2x256xf32>
      %c0_30 = arith.constant 0 : index
      %c0_31 = arith.constant 0 : index
      %36 = vector.load %arg5[%c0_30, %c0_31] : memref<256x128xf32, #tpu.memory_space<vmem>>, vector<256x128xf32>
      %cst_32 = arith.constant dense<0.000000e+00> : vector<2x128xf32>
      %37 = tpu.matmul %35, %36, %cst_32 {dimension_numbers = #tpu.dot_dimension_numbers<[1], [0], [0], [1], [0, 0, 1, 1], [], []>} : vector<2x256xf32>, vector<256x128xf32>, vector<2x128xf32> -> vector<2x128xf32>
      %c0_33 = arith.constant 0 : index
      %c0_34 = arith.constant 0 : index
      %38 = vector.load %arg6[%c0_33, %c0_34] : memref<1x128xf32, #tpu.memory_space<vmem>>, vector<1x128xf32>
      %39 = vector.broadcast %38 : vector<1x128xf32> to vector<2x128xf32>
      %40 = arith.addf %37, %39 : vector<2x128xf32>
      %cst_35 = arith.constant 0.000000e+00 : f32
      %41 = vector.broadcast %cst_35 : f32 to vector<2x128xf32>
      %42 = arith.cmpf ogt, %40, %41 : vector<2x128xf32>
      %cst_36 = arith.constant 2.000000e-01 : f32
      %43 = vector.broadcast %cst_36 : f32 to vector<2x128xf32>
      %44 = arith.mulf %43, %40 : vector<2x128xf32>
      %45 = arith.select %42, %40, %44 : vector<2x128xi1>, vector<2x128xf32>
      %c0_37 = arith.constant 0 : index
      %c0_38 = arith.constant 0 : index
      %46 = vector.load %arg7[%c0_37, %c0_38] : memref<128x128xf32, #tpu.memory_space<vmem>>, vector<128x128xf32>
      %cst_39 = arith.constant dense<0.000000e+00> : vector<2x128xf32>
      %47 = tpu.matmul %45, %46, %cst_39 {dimension_numbers = #tpu.dot_dimension_numbers<[1], [0], [0], [1], [0, 0, 1, 1], [], []>} : vector<2x128xf32>, vector<128x128xf32>, vector<2x128xf32> -> vector<2x128xf32>
      %c0_40 = arith.constant 0 : index
      %c0_41 = arith.constant 0 : index
      %48 = vector.load %arg8[%c0_40, %c0_41] : memref<1x128xf32, #tpu.memory_space<vmem>>, vector<1x128xf32>
      %49 = vector.broadcast %48 : vector<1x128xf32> to vector<2x128xf32>
      %50 = arith.addf %47, %49 : vector<2x128xf32>
      %c0_42 = arith.constant 0 : index
      %c0_43 = arith.constant 0 : index
      %51 = vector.load %arg9[%c0_42, %c0_43] : memref<2x128xf32, #tpu.memory_space<vmem>>, vector<2x128xf32>
      tpu.vector_store %arg9[%c0_42, %c0_43], %50 {strides = array<i32>} : memref<2x128xf32, #tpu.memory_space<vmem>>, vector<2x128xf32>,
    } else {
    }
    return
  }
  func.func @transform_0(%arg0: i32, %arg1: i32) -> (i32, i32, i32) {
    %c0_i32 = arith.constant 0 : i32
    %c0_i32_0 = arith.constant 0 : i32
    return %arg0, %c0_i32, %arg1 : i32, i32, i32
  }
  func.func @transform_1(%arg0: i32, %arg1: i32) -> (i32, i32) {
    %c0_i32 = arith.constant 0 : i32
    %c0_i32_0 = arith.constant 0 : i32
    %c0_i32_1 = arith.constant 0 : i32
    return %c0_i32, %c0_i32_0 : i32, i32
  }
  func.func @transform_2(%arg0: i32, %arg1: i32) -> (i32, i32) {
    %c0_i32 = arith.constant 0 : i32
    %c0_i32_0 = arith.constant 0 : i32
    %c0_i32_1 = arith.constant 0 : i32
    return %c0_i32, %c0_i32_0 : i32, i32
  }
  func.func @transform_3(%arg0: i32, %arg1: i32) -> (i32, i32) {
    %c0_i32 = arith.constant 0 : i32
    %c0_i32_0 = arith.constant 0 : i32
    %c0_i32_1 = arith.constant 0 : i32
    return %c0_i32, %c0_i32_0 : i32, i32
  }
  func.func @transform_4(%arg0: i32, %arg1: i32) -> (i32, i32) {
    %c0_i32 = arith.constant 0 : i32
    %c0_i32_0 = arith.constant 0 : i32
    %c0_i32_1 = arith.constant 0 : i32
    return %c0_i32, %c0_i32_0 : i32, i32
  }
  func.func @transform_5(%arg0: i32, %arg1: i32) -> (i32, i32) {
    %c0_i32 = arith.constant 0 : i32
    %c0_i32_0 = arith.constant 0 : i32
    %c0_i32_1 = arith.constant 0 : i32
    return %c0_i32, %c0_i32_0 : i32, i32
  }
  func.func @transform_6(%arg0: i32, %arg1: i32) -> (i32, i32) {
    %c0_i32 = arith.constant 0 : i32
    %c0_i32_0 = arith.constant 0 : i32
    %c0_i32_1 = arith.constant 0 : i32
    return %c0_i32, %c0_i32_0 : i32, i32
  }
  func.func @transform_7(%arg0: i32, %arg1: i32) -> (i32, i32) {
    %c0_i32 = arith.constant 0 : i32
    %c0_i32_0 = arith.constant 0 : i32
    return %arg0, %c0_i32 : i32, i32
  }
}

</mosaic_0001>

<llo_original>
// kernel: tpu_custom_call.1
$region0: #{tpu_custom_call.1}
  #allocation0 [shape = 'u32[]', space=smem, size = 0x4, offset = 0x4, fixed_abs, tag = 'smem constant byte address 0x4 - core index']
  #allocation1 [shape = 'u32[144,128]{1,0:T(1,128)}', space=vmem, size = 0x12000, scoped, tag = 'internal scratch']
  #allocation2 [shape = 'f32[2,4,4]{2,1,0:T(4,128)}', space=vmem, size = 0x1000, scoped, tag = 'scratch operand']
  #allocation3 [shape = 'f32[2,16]{1,0:T(2,128)}', space=vmem, size = 0x400, scoped, tag = 'scratch operand']
  %s0 = inlined_call_operand.hbm [shape: f32[2,4,256], index: 0, kind: input, shape index: {}]
  %s1 = inlined_call_operand.hbm [shape: bf16[16,256], index: 1, kind: input, shape index: {}]
  %s2 = inlined_call_operand.vmem [shape: f32[1,256], index: 2, kind: input, shape index: {}]
  %s3 = inlined_call_operand.hbm [shape: f32[256,128], index: 3, kind: input, shape index: {}]
  %s4 = inlined_call_operand.vmem [shape: f32[1,128], index: 4, kind: input, shape index: {}]
  %s5 = inlined_call_operand.hbm [shape: f32[128,128], index: 5, kind: input, shape index: {}]
  %s6 = inlined_call_operand.vmem [shape: f32[1,128], index: 6, kind: input, shape index: {}]
  %s7 = inlined_call_operand.hbm [shape: f32[2,128], index: 7, kind: output, shape index: {}]
  %s8 = sld [smem:[#allocation0]]
  $region66: #{tpu_custom_call.1} parent=0
    _
  %s10 = ssub.s32 1, %s8
  %s11 = scalar_select 0, %s10, %s8
  $region1: #{tpu_custom_call.1} parent=0
    #allocation4 [shape = 'u8[8192]{0}', space=vmem, size = 0x2000, scoped, tag = 'input window, operand 0, single buffered']
    #allocation5 [shape = 's32[1]{0}', space=sflag, size = 0x4, scoped, tag = 'scoped memory for tpu_custom_call.1']
    #allocation6 [shape = 's32[1]{0}', space=sflag, size = 0x4, scoped, tag = 'scoped memory for tpu_custom_call.1']
    #allocation7 [shape = 'u8[8192]{0}', space=vmem, size = 0x2000, scoped, tag = 'input window, operand 1, single buffered']
    #allocation8 [shape = 's32[1]{0}', space=sflag, size = 0x4, scoped, tag = 'scoped memory for tpu_custom_call.1']
    #allocation9 [shape = 'u8[131072]{0}', space=vmem, size = 0x20000, scoped, tag = 'input window, operand 3, single buffered']
    #allocation10 [shape = 'u8[65536]{0}', space=vmem, size = 0x10000, scoped, tag = 'input window, operand 5, single buffered']
    #allocation11 [shape = 's32[1]{0}', space=sflag, size = 0x4, scoped, tag = 'scoped memory for tpu_custom_call.1']
    #allocation12 [shape = 'u8[1024]{0}', space=vmem, size = 0x400, scoped, tag = 'output window, operand 0, single buffered']
    %12 = vsyncpa [#allocation5], 0
    %13 = vsyncpa [#allocation8], 0
    %14 = vsyncpa [#allocation11], 0
    %15 = vsyncpa [#allocation6], 0
    // Predicated region
    $region2: #{tpu_custom_call.1} parent=1 // pred_check
      _
    $region3: #{tpu_custom_call.1} parent=1 // pred_check_branch
      %17 = sbr.rel (0) target = $region5
    $region4: #{tpu_custom_call.1} parent=1 // pred_region
      %s19 = ssub.s32 256, 256
      %20 = vsyncadd [#allocation5], %s19
      %s21 = sshll.u32 [#allocation4], 4
      %s22 = int_to_ptr.vmem [resolvable:$true] %s21
      %27 = dma.hbm_to_vmem [thread:$0]  %s0, 256, %s22, [#allocation5], 128, 128, 8
    $region5: #{tpu_custom_call.1} parent=1 // pred_fallthru
      _
    // Predicated region
    $region6: #{tpu_custom_call.1} parent=1 // pred_check
      _
    $region7: #{tpu_custom_call.1} parent=1 // pred_check_branch
      %29 = sbr.rel (0) target = $region9
    $region8: #{tpu_custom_call.1} parent=1 // pred_region
      %s31 = ssub.s32 256, 256
      %32 = vsyncadd [#allocation8], %s31
      %s33 = sshll.u32 [#allocation7], 4
      %s34 = int_to_ptr.vmem [resolvable:$true] %s33
      %39 = dma.hbm_to_vmem [thread:$0]  %s1, 256, %s34, [#allocation8], 128, 128, 8
    $region9: #{tpu_custom_call.1} parent=1 // pred_fallthru
      _
    // Predicated region
    $region10: #{tpu_custom_call.1} parent=1 // pred_check
      _
    $region11: #{tpu_custom_call.1} parent=1 // pred_check_branch
      %41 = sbr.rel (0) target = $region13
    $region12: #{tpu_custom_call.1} parent=1 // pred_region
      _
    $region13: #{tpu_custom_call.1} parent=1 // pred_fallthru
      _
    // Predicated region
    $region14: #{tpu_custom_call.1} parent=1 // pred_check
      _
    $region15: #{tpu_custom_call.1} parent=1 // pred_check_branch
      %43 = sbr.rel (0) target = $region17
    $region16: #{tpu_custom_call.1} parent=1 // pred_region
      %s45 = ssub.s32 4096, 4096
      %46 = vsyncadd [#allocation8], %s45
      %s47 = sshll.u32 [#allocation9], 4
      %s48 = int_to_ptr.vmem [resolvable:$true] %s47
      %53 = dma.hbm_to_vmem [thread:$0]  %s3, 4096, %s48, [#allocation8], 128, 128, 8
    $region17: #{tpu_custom_call.1} parent=1 // pred_fallthru
      _
    // Predicated region
    $region18: #{tpu_custom_call.1} parent=1 // pred_check
      _
    $region19: #{tpu_custom_call.1} parent=1 // pred_check_branch
      %55 = sbr.rel (0) target = $region21
    $region20: #{tpu_custom_call.1} parent=1 // pred_region
      _
    $region21: #{tpu_custom_call.1} parent=1 // pred_fallthru
      _
    // Predicated region
    $region22: #{tpu_custom_call.1} parent=1 // pred_check
      _
    $region23: #{tpu_custom_call.1} parent=1 // pred_check_branch
      %57 = sbr.rel (0) target = $region25
    $region24: #{tpu_custom_call.1} parent=1 // pred_region
      %s59 = ssub.s32 2048, 2048
      %60 = vsyncadd [#allocation11], %s59
      %s61 = sshll.u32 [#allocation10], 4
      %s62 = int_to_ptr.vmem [resolvable:$true] %s61
      %67 = dma.hbm_to_vmem [thread:$0]  %s5, 2048, %s62, [#allocation11], 128, 128, 8
    $region25: #{tpu_custom_call.1} parent=1 // pred_fallthru
      _
    // Predicated region
    $region26: #{tpu_custom_call.1} parent=1 // pred_check
      _
    $region27: #{tpu_custom_call.1} parent=1 // pred_check_branch
      %69 = sbr.rel (0) target = $region29
    $region28: #{tpu_custom_call.1} parent=1 // pred_region
      _
    $region29: #{tpu_custom_call.1} parent=1 // pred_fallthru
      _
    // Predicated region
    $region30: #{tpu_custom_call.1} parent=1 // pred_check
      _
    $region31: #{tpu_custom_call.1} parent=1 // pred_check_branch
      %71 = sbr.rel (0) target = $region33
    $region32: #{tpu_custom_call.1} parent=1 // pred_region
      %72 = dma.done [#allocation5], 256
    $region33: #{tpu_custom_call.1} parent=1 // pred_fallthru
      _
    // Predicated region
    $region34: #{tpu_custom_call.1} parent=1 // pred_check
      _
    $region35: #{tpu_custom_call.1} parent=1 // pred_check_branch
      %74 = sbr.rel (0) target = $region37
    $region36: #{tpu_custom_call.1} parent=1 // pred_region
      %75 = dma.done [#allocation8], 256
    $region37: #{tpu_custom_call.1} parent=1 // pred_fallthru
      _
    // Predicated region
    $region38: #{tpu_custom_call.1} parent=1 // pred_check
      _
    $region39: #{tpu_custom_call.1} parent=1 // pred_check_branch
      %77 = sbr.rel (0) target = $region41
    $region40: #{tpu_custom_call.1} parent=1 // pred_region
      %78 = dma.done [#allocation8], 4096
    $region41: #{tpu_custom_call.1} parent=1 // pred_fallthru
      _
    // Predicated region
    $region42: #{tpu_custom_call.1} parent=1 // pred_check
      _
    $region43: #{tpu_custom_call.1} parent=1 // pred_check_branch
      %80 = sbr.rel (0) target = $region45
    $region44: #{tpu_custom_call.1} parent=1 // pred_region
      %81 = dma.done [#allocation11], 2048
    $region45: #{tpu_custom_call.1} parent=1 // pred_fallthru
      _
    %v83 = vld [vmem:[#allocation4] sm:$0xff]
    %v84 = vld [vmem:[#allocation4 + $0x8] sm:$0xff]
    %v87 = vcombine.high %v83, %v83
    %v88 = vcombine.high %v84, %v84
    %v91 = vpack.c.bf16 %v83, %v83
    %v92 = vpack.c.bf16 %v87, %v87
    %v93 = vpack.c.bf16 %v84, %v84
    %v94 = vpack.c.bf16 %v88, %v88
    %95 = vmatprep.subr.bf16.mxu0 %v92
    %96 = vmatpush1.bf16.xpose.msra.mxu0 %v91
    %97 = vmatprep.subr.bf16.mxu0 0
    %98 = vmatpush1.bf16.xpose.msra.mxu0 0
    %99 = vmatprep.subr.bf16.mxu0 0
    %100 = vmatpush1.bf16.xpose.msra.mxu0 0
    %101 = vmatprep.subr.bf16.mxu0 0
    %102 = vmatpush1.bf16.xpose.msra.mxu0 0
    %103 = vmatprep.subr.bf16.mxu0 0
    %104 = vmatpush1.bf16.xpose.msra.mxu0 0
    %105 = vmatprep.subr.bf16.mxu0 0
    %106 = vmatpush1.bf16.xpose.msra.mxu0 0
    %107 = vmatprep.subr.bf16.mxu0 0
    %108 = vmatpush1.bf16.xpose.msra.mxu0 0
    %109 = vmatprep.subr.bf16.mxu0 0
    %110 = vmatpush1.bf16.xpose.msra.mxu0 0
    %111 = vmatprep.subr.bf16.mxu0 0
    %112 = vmatpush1.bf16.xpose.msra.mxu0 0
    %113 = vmatprep.subr.bf16.mxu0 0
    %114 = vmatpush1.bf16.xpose.msra.mxu0 0
    %115 = vmatprep.subr.bf16.mxu0 0
    %116 = vmatpush1.bf16.xpose.msra.mxu0 0
    %117 = vmatprep.subr.bf16.mxu0 0
    %118 = vmatpush1.bf16.xpose.msra.mxu0 0
    %119 = vmatprep.subr.bf16.mxu0 0
    %120 = vmatpush1.bf16.xpose.msra.mxu0 0
    %121 = vmatprep.subr.bf16.mxu0 0
    %122 = vmatpush1.bf16.xpose.msra.mxu0 0
    %123 = vmatprep.subr.bf16.mxu0 0
    %124 = vmatpush1.bf16.xpose.msra.mxu0 0
    %125 = vmatprep.subr.bf16.mxu0 0
    %126 = vmatpush1.bf16.xpose.msra.mxu0 0
    %127 = vmatprep.mubr.bf16.mxu0 %v92
    %128 = vmatmul.mubr.bf16.gmra.mrb[0].mxu0 %v91
    %v129 = vpop.f32.mrb[0].mxu0
    %v130 = vadd.f32 0.0, %v129
    %v131 = vpop.f32.mrb[0].mxu0
    %v132 = vpop.f32.mrb[0].mxu0
    %v133 = vpop.f32.mrb[0].mxu0
    %134 = vdwg.mxu0
    %135 = vmatprep.subr.bf16.mxu0 %v94
    %136 = vmatpush1.bf16.xpose.msra.mxu0 %v93
    %137 = vmatprep.subr.bf16.mxu0 0
    %138 = vmatpush1.bf16.xpose.msra.mxu0 0
    %139 = vmatprep.subr.bf16.mxu0 0
    %140 = vmatpush1.bf16.xpose.msra.mxu0 0
    %141 = vmatprep.subr.bf16.mxu0 0
    %142 = vmatpush1.bf16.xpose.msra.mxu0 0
    %143 = vmatprep.subr.bf16.mxu0 0
    %144 = vmatpush1.bf16.xpose.msra.mxu0 0
    %145 = vmatprep.subr.bf16.mxu0 0
    %146 = vmatpush1.bf16.xpose.msra.mxu0 0
    %147 = vmatprep.subr.bf16.mxu0 0
    %148 = vmatpush1.bf16.xpose.msra.mxu0 0
    %149 = vmatprep.subr.bf16.mxu0 0
    %150 = vmatpush1.bf16.xpose.msra.mxu0 0
    %151 = vmatprep.subr.bf16.mxu0 0
    %152 = vmatpush1.bf16.xpose.msra.mxu0 0
    %153 = vmatprep.subr.bf16.mxu0 0
    %154 = vmatpush1.bf16.xpose.msra.mxu0 0
    %155 = vmatprep.subr.bf16.mxu0 0
    %156 = vmatpush1.bf16.xpose.msra.mxu0 0
    %157 = vmatprep.subr.bf16.mxu0 0
    %158 = vmatpush1.bf16.xpose.msra.mxu0 0
    %159 = vmatprep.subr.bf16.mxu0 0
    %160 = vmatpush1.bf16.xpose.msra.mxu0 0
    %161 = vmatprep.subr.bf16.mxu0 0
    %162 = vmatpush1.bf16.xpose.msra.mxu0 0
    %163 = vmatprep.subr.bf16.mxu0 0
    %164 = vmatpush1.bf16.xpose.msra.mxu0 0
    %165 = vmatprep.subr.bf16.mxu0 0
    %166 = vmatpush1.bf16.xpose.msra.mxu0 0
    %167 = vmatprep.mubr.bf16.mxu0 %v94
    %168 = vmatmul.mubr.bf16.gmra.mrb[0].mxu0 %v93
    %v169 = vpop.f32.mrb[0].mxu0
    %v170 = vadd.f32 0.0, %v169
    %v171 = vpop.f32.mrb[0].mxu0
    %v172 = vpop.f32.mrb[0].mxu0
    %v173 = vpop.f32.mrb[0].mxu0
    %174 = vdwg.mxu0
    %p175 = scmp.eq.s32.totalorder 0, 0
    // Predicated region
    $region46: #{tpu_custom_call.1} parent=1 // pred_check
      %p176 = pneg %p175
    $region47: #{tpu_custom_call.1} parent=1 // pred_check_branch
      %178 = sbr.rel (%p176) target = $region49
    $region48: #{tpu_custom_call.1} parent=1 // pred_region
      %vm179 = vcmask 27648
      %180 = vst.msk [vmem:[#allocation2] sm:$0xf] %vm179, %v130
      %181 = vst.msk [vmem:[#allocation2 + $0x4] sm:$0xf] %vm179, %v170
    $region49: #{tpu_custom_call.1} parent=1 // pred_fallthru
      _
    %p182 = scmp.gt.s32.totalorder 0, 0
    // Predicated region
    $region50: #{tpu_custom_call.1} parent=1 // pred_check
      %p183 = pneg %p182
    $region51: #{tpu_custom_call.1} parent=1 // pred_check_branch
      %185 = sbr.rel (%p183) target = $region53
    $region52: #{tpu_custom_call.1} parent=1 // pred_region
      %v186 = vld [vmem:[#allocation2] sm:$0xf]
      %v187 = vld [vmem:[#allocation2 + $0x4] sm:$0xf]
      %v188 = vadd.f32 %v186, %v130
      %v189 = vadd.f32 %v187, %v170
      %vm190 = vcmask 27648
      %191 = vst.msk [vmem:[#allocation2] sm:$0xf] %vm190, %v188
      %192 = vst.msk [vmem:[#allocation2 + $0x4] sm:$0xf] %vm190, %v189
    $region53: #{tpu_custom_call.1} parent=1 // pred_fallthru
      _
    // Predicated region
    $region54: #{tpu_custom_call.1} parent=1 // pred_check
      %p193 = pneg %p175
    $region55: #{tpu_custom_call.1} parent=1 // pred_check_branch
      %195 = sbr.rel (%p193) target = $region57
    $region56: #{tpu_custom_call.1} parent=1 // pred_region
      %v196 = vld [vmem:[#allocation2] sm:$0x1]
      %v197 = vld [vmem:[#allocation2 + $0x4] sm:$0x1]
      %v200 = vrot.slane %v197, 7
      %vm201 = vcmask 1041409
      %v202 = vsel %vm201, %v200, %v196
      %vm204 = vcmask 25600
      %205 = vst.msk [vmem:[#allocation3] sm:$0x3] %vm204, %v202
      %v206 = vld [vmem:[#allocation2 + $0x1] sm:$0x1]
      %v207 = vld [vmem:[#allocation2 + $0x5] sm:$0x1]
      %v210 = vrot.slane %v207, 7
      %v211 = vsel %vm201, %v210, %v206
      %212 = vrot.lane.b32.xlu0 %v211, 4
      %v213 = vpop.permute.xlu0 %212
      %vm215 = vcmask 58400
      %216 = vst.msk [vmem:[#allocation3] sm:$0x3] %vm215, %v213
      %v217 = vld [vmem:[#allocation2 + $0x2] sm:$0x1]
      %v218 = vld [vmem:[#allocation2 + $0x6] sm:$0x1]
      %v221 = vrot.slane %v218, 7
      %v222 = vsel %vm201, %v221, %v217
      %223 = vrot.lane.b32.xlu0 %v222, 8
      %v224 = vpop.permute.xlu0 %223
      %vm226 = vcmask 91200
      %227 = vst.msk [vmem:[#allocation3] sm:$0x3] %vm226, %v224
      %v228 = vld [vmem:[#allocation2 + $0x3] sm:$0x1]
      %v229 = vld [vmem:[#allocation2 + $0x7] sm:$0x1]
      %v232 = vrot.slane %v229, 7
      %v233 = vsel %vm201, %v232, %v228
      %234 = vrot.lane.b32.xlu0 %v233, 12
      %v235 = vpop.permute.xlu0 %234
      %vm237 = vcmask 124000
      %238 = vst.msk [vmem:[#allocation3] sm:$0x3] %vm237, %v235
      %v239 = vld [vmem:[#allocation3] sm:$0x3]
      %v240 = vpack.c.bf16 %v239, %v239
      %v241 = vld [vmem:[#allocation7] sm:$0xff]
      %v242 = vld [vmem:[#allocation7 + $0x8] sm:$0xff]
      %v243 = vld [vmem:[%s2] sm:$0x3]
      %v245 = vlaneseq
      %v246 = vshrl.u32 %v245, 7
      %v247 = vsub.s32 0, %v246
      %v248 = vrot.slane %v243, %v247
      %v249 = vlaneseq
      %v250 = vshrl.u32 %v249, 7
      %v251 = vsub.s32 1, %v250
      %v252 = vrot.slane %v243, %v251
      %v257 = vunpack.c.l.b16 %v241
      %v258 = vunpack.c.h.b16 %v241
      %v259 = vunpack.c.l.b16 %v242
      %v260 = vunpack.c.h.b16 %v242
      %v261 = vpack.c.b16 %v259, %v257
      %v262 = vpack.c.b16 %v260, %v258
      %vm265 = vcmask 130048
      %v267 = vsel %vm265, %v240, 0
      %269 = vmatprep.subr.bf16.mxu0 %v262
      %270 = vmatpush1.bf16.msra.mxu0 %v261
      %271 = vmatprep.subr.bf16.mxu0 0
      %272 = vmatpush1.bf16.msra.mxu0 0
      %273 = vmatprep.subr.bf16.mxu0 0
      %274 = vmatpush1.bf16.msra.mxu0 0
      %275 = vmatprep.subr.bf16.mxu0 0
      %276 = vmatpush1.bf16.msra.mxu0 0
      %277 = vmatprep.subr.bf16.mxu0 0
      %278 = vmatpush1.bf16.msra.mxu0 0
      %279 = vmatprep.subr.bf16.mxu0 0
      %280 = vmatpush1.bf16.msra.mxu0 0
      %281 = vmatprep.subr.bf16.mxu0 0
      %282 = vmatpush1.bf16.msra.mxu0 0
      %283 = vmatprep.subr.bf16.mxu0 0
      %284 = vmatpush1.bf16.msra.mxu0 0
      %285 = vmatprep.subr.bf16.mxu0 0
      %286 = vmatpush1.bf16.msra.mxu0 0
      %287 = vmatprep.subr.bf16.mxu0 0
      %288 = vmatpush1.bf16.msra.mxu0 0
      %289 = vmatprep.subr.bf16.mxu0 0
      %290 = vmatpush1.bf16.msra.mxu0 0
      %291 = vmatprep.subr.bf16.mxu0 0
      %292 = vmatpush1.bf16.msra.mxu0 0
      %293 = vmatprep.subr.bf16.mxu0 0
      %294 = vmatpush1.bf16.msra.mxu0 0
      %295 = vmatprep.subr.bf16.mxu0 0
      %296 = vmatpush1.bf16.msra.mxu0 0
      %297 = vmatprep.subr.bf16.mxu0 0
      %298 = vmatpush1.bf16.msra.mxu0 0
      %299 = vmatprep.subr.bf16.mxu0 0
      %300 = vmatpush1.bf16.msra.mxu0 0
      %301 = vmatprep.mubr.bf16.mxu0 0
      %302 = vmatmul.mubr.bf16.gmra.mrb[0].mxu0 %v267
      %v303 = vpop.f32.mrb[0].mxu0
      %v304 = vadd.f32 %v248, %v303
      %v305 = vpop.f32.mrb[0].mxu0
      %v306 = vadd.f32 %v252, %v305
      %v307 = vpop.f32.mrb[0].mxu0
      %v308 = vpop.f32.mrb[0].mxu0
      %309 = vdwg.mxu0
      %vm310 = vcmp.gt.f32.partialorder %v304, 0.0
      %vm311 = vcmp.gt.f32.partialorder %v306, 0.0
      %v312 = vmul.f32 %v304, 0.2
      %v313 = vmul.f32 %v306, 0.2
      %v314 = vsel %vm310, %v304, %v312
      %v315 = vsel %vm311, %v306, %v313
      %v316 = vld [vmem:[#allocation9] sm:$0xff]
      %v317 = vld [vmem:[#allocation9 + $0x8] sm:$0xff]
      %v318 = vld [vmem:[#allocation9 + $0x10] sm:$0xff]
      %v319 = vld [vmem:[#allocation9 + $0x18] sm:$0xff]
      %v320 = vld [vmem:[#allocation9 + $0x20] sm:$0xff]
      %v321 = vld [vmem:[#allocation9 + $0x28] sm:$0xff]
      %v322 = vld [vmem:[#allocation9 + $0x30] sm:$0xff]
      %v323 = vld [vmem:[#allocation9 + $0x38] sm:$0xff]
      %v324 = vld [vmem:[#allocation9 + $0x40] sm:$0xff]
      %v325 = vld [vmem:[#allocation9 + $0x48] sm:$0xff]
      %v326 = vld [vmem:[#allocation9 + $0x50] sm:$0xff]
      %v327 = vld [vmem:[#allocation9 + $0x58] sm:$0xff]
      %v328 = vld [vmem:[#allocation9 + $0x60] sm:$0xff]
      %v329 = vld [vmem:[#allocation9 + $0x68] sm:$0xff]
      %v330 = vld [vmem:[#allocation9 + $0x70] sm:$0xff]
      %v331 = vld [vmem:[#allocation9 + $0x78] sm:$0xff]
      %v332 = vld [vmem:[#allocation9 + $0x80] sm:$0xff]
      %v333 = vld [vmem:[#allocation9 + $0x88] sm:$0xff]
      %v334 = vld [vmem:[#allocation9 + $0x90] sm:$0xff]
      %v335 = vld [vmem:[#allocation9 + $0x98] sm:$0xff]
      %v336 = vld [vmem:[#allocation9 + $0xa0] sm:$0xff]
      %v337 = vld [vmem:[#allocation9 + $0xa8] sm:$0xff]
      %v338 = vld [vmem:[#allocation9 + $0xb0] sm:$0xff]
      %v339 = vld [vmem:[#allocation9 + $0xb8] sm:$0xff]
      %v340 = vld [vmem:[#allocation9 + $0xc0] sm:$0xff]
      %v341 = vld [vmem:[#allocation9 + $0xc8] sm:$0xff]
      %v342 = vld [vmem:[#allocation9 + $0xd0] sm:$0xff]
      %v343 = vld [vmem:[#allocation9 + $0xd8] sm:$0xff]
      %v344 = vld [vmem:[#allocation9 + $0xe0] sm:$0xff]
      %v345 = vld [vmem:[#allocation9 + $0xe8] sm:$0xff]
      %v346 = vld [vmem:[#allocation9 + $0xf0] sm:$0xff]
      %v347 = vld [vmem:[#allocation9 + $0xf8] sm:$0xff]
      %v348 = vld [vmem:[%s4] sm:$0x1]
      %v350 = vlaneseq
      %v351 = vshrl.u32 %v350, 7
      %v352 = vsub.s32 0, %v351
      %v353 = vrot.slane %v348, %v352
      %355 = vmatprep.subr.mxu0 0.0
      %356 = vmatpush1.msra.mxu0 %v316
      %357 = vmatprep.subr.mxu0 0.0
      %358 = vmatpush1.msra.mxu0 %v317
      %359 = vmatprep.subr.mxu0 0.0
      %360 = vmatpush1.msra.mxu0 %v318
      %361 = vmatprep.subr.mxu0 0.0
      %362 = vmatpush1.msra.mxu0 %v319
      %363 = vmatprep.subr.mxu0 0.0
      %364 = vmatpush1.msra.mxu0 %v320
      %365 = vmatprep.subr.mxu0 0.0
      %366 = vmatpush1.msra.mxu0 %v321
      %367 = vmatprep.subr.mxu0 0.0
      %368 = vmatpush1.msra.mxu0 %v322
      %369 = vmatprep.subr.mxu0 0.0
      %370 = vmatpush1.msra.mxu0 %v323
      %371 = vmatprep.subr.mxu0 0.0
      %372 = vmatpush1.msra.mxu0 %v324
      %373 = vmatprep.subr.mxu0 0.0
      %374 = vmatpush1.msra.mxu0 %v325
      %375 = vmatprep.subr.mxu0 0.0
      %376 = vmatpush1.msra.mxu0 %v326
      %377 = vmatprep.subr.mxu0 0.0
      %378 = vmatpush1.msra.mxu0 %v327
      %379 = vmatprep.subr.mxu0 0.0
      %380 = vmatpush1.msra.mxu0 %v328
      %381 = vmatprep.subr.mxu0 0.0
      %382 = vmatpush1.msra.mxu0 %v329
      %383 = vmatprep.subr.mxu0 0.0
      %384 = vmatpush1.msra.mxu0 %v330
      %385 = vmatprep.subr.mxu0 0.0
      %386 = vmatpush1.msra.mxu0 %v331
      %387 = vmatprep.subr.mxu0 0.0
      %388 = vmatpush1.msra.mxu0 %v332
      %389 = vmatprep.subr.mxu0 0.0
      %390 = vmatpush1.msra.mxu0 %v333
      %391 = vmatprep.subr.mxu0 0.0
      %392 = vmatpush1.msra.mxu0 %v334
      %393 = vmatprep.subr.mxu0 0.0
      %394 = vmatpush1.msra.mxu0 %v335
      %395 = vmatprep.subr.mxu0 0.0
      %396 = vmatpush1.msra.mxu0 %v336
      %397 = vmatprep.subr.mxu0 0.0
      %398 = vmatpush1.msra.mxu0 %v337
      %399 = vmatprep.subr.mxu0 0.0
      %400 = vmatpush1.msra.mxu0 %v338
      %401 = vmatprep.subr.mxu0 0.0
      %402 = vmatpush1.msra.mxu0 %v339
      %403 = vmatprep.subr.mxu0 0.0
      %404 = vmatpush1.msra.mxu0 %v340
      %405 = vmatprep.subr.mxu0 0.0
      %406 = vmatpush1.msra.mxu0 %v341
      %407 = vmatprep.subr.mxu0 0.0
      %408 = vmatpush1.msra.mxu0 %v342
      %409 = vmatprep.subr.mxu0 0.0
      %410 = vmatpush1.msra.mxu0 %v343
      %411 = vmatprep.subr.mxu0 0.0
      %412 = vmatpush1.msra.mxu0 %v344
      %413 = vmatprep.subr.mxu0 0.0
      %414 = vmatpush1.msra.mxu0 %v345
      %415 = vmatprep.subr.mxu0 0.0
      %416 = vmatpush1.msra.mxu0 %v346
      %417 = vmatprep.subr.mxu0 0.0
      %418 = vmatpush1.msra.mxu0 %v347
      %419 = vmatprep.mubr.f32.mxu0 %v315
      %420 = vmatmul.mubr.f32.gmra.mrb[0].mxu0 %v314
      %v421 = vpop.f32.mrb[0].mxu0
      %v422 = vadd.f32 %v353, %v421
      %v423 = vpop.f32.mrb[0].mxu0
      %424 = vdwg.mxu0
      %vm425 = vcmp.gt.f32.partialorder %v422, 0.0
      %v426 = vmul.f32 %v422, 0.2
      %v427 = vsel %vm425, %v422, %v426
      %v428 = vld [vmem:[#allocation10] sm:$0xff]
      %v429 = vld [vmem:[#allocation10 + $0x8] sm:$0xff]
      %v430 = vld [vmem:[#allocation10 + $0x10] sm:$0xff]
      %v431 = vld [vmem:[#allocation10 + $0x18] sm:$0xff]
      %v432 = vld [vmem:[#allocation10 + $0x20] sm:$0xff]
      %v433 = vld [vmem:[#allocation10 + $0x28] sm:$0xff]
      %v434 = vld [vmem:[#allocation10 + $0x30] sm:$0xff]
      %v435 = vld [vmem:[#allocation10 + $0x38] sm:$0xff]
      %v436 = vld [vmem:[#allocation10 + $0x40] sm:$0xff]
      %v437 = vld [vmem:[#allocation10 + $0x48] sm:$0xff]
      %v438 = vld [vmem:[#allocation10 + $0x50] sm:$0xff]
      %v439 = vld [vmem:[#allocation10 + $0x58] sm:$0xff]
      %v440 = vld [vmem:[#allocation10 + $0x60] sm:$0xff]
      %v441 = vld [vmem:[#allocation10 + $0x68] sm:$0xff]
      %v442 = vld [vmem:[#allocation10 + $0x70] sm:$0xff]
      %v443 = vld [vmem:[#allocation10 + $0x78] sm:$0xff]
      %v444 = vld [vmem:[%s6] sm:$0x1]
      %v446 = vlaneseq
      %v447 = vshrl.u32 %v446, 7
      %v448 = vsub.s32 0, %v447
      %v449 = vrot.slane %v444, %v448
      %451 = vmatprep.subr.mxu0 0.0
      %452 = vmatpush1.msra.mxu0 %v428
      %453 = vmatprep.subr.mxu0 0.0
      %454 = vmatpush1.msra.mxu0 %v429
      %455 = vmatprep.subr.mxu0 0.0
      %456 = vmatpush1.msra.mxu0 %v430
      %457 = vmatprep.subr.mxu0 0.0
      %458 = vmatpush1.msra.mxu0 %v431
      %459 = vmatprep.subr.mxu0 0.0
      %460 = vmatpush1.msra.mxu0 %v432
      %461 = vmatprep.subr.mxu0 0.0
      %462 = vmatpush1.msra.mxu0 %v433
      %463 = vmatprep.subr.mxu0 0.0
      %464 = vmatpush1.msra.mxu0 %v434
      %465 = vmatprep.subr.mxu0 0.0
      %466 = vmatpush1.msra.mxu0 %v435
      %467 = vmatprep.subr.mxu0 0.0
      %468 = vmatpush1.msra.mxu0 %v436
      %469 = vmatprep.subr.mxu0 0.0
      %470 = vmatpush1.msra.mxu0 %v437
      %471 = vmatprep.subr.mxu0 0.0
      %472 = vmatpush1.msra.mxu0 %v438
      %473 = vmatprep.subr.mxu0 0.0
      %474 = vmatpush1.msra.mxu0 %v439
      %475 = vmatprep.subr.mxu0 0.0
      %476 = vmatpush1.msra.mxu0 %v440
      %477 = vmatprep.subr.mxu0 0.0
      %478 = vmatpush1.msra.mxu0 %v441
      %479 = vmatprep.subr.mxu0 0.0
      %480 = vmatpush1.msra.mxu0 %v442
      %481 = vmatprep.subr.mxu0 0.0
      %482 = vmatpush1.msra.mxu0 %v443
      %483 = vmatprep.subr.mxu0 0.0
      %484 = vmatpush1.msra.mxu0 0.0
      %485 = vmatprep.subr.mxu0 0.0
      %486 = vmatpush1.msra.mxu0 0.0
      %487 = vmatprep.subr.mxu0 0.0
      %488 = vmatpush1.msra.mxu0 0.0
      %489 = vmatprep.subr.mxu0 0.0
      %490 = vmatpush1.msra.mxu0 0.0
      %491 = vmatprep.subr.mxu0 0.0
      %492 = vmatpush1.msra.mxu0 0.0
      %493 = vmatprep.subr.mxu0 0.0
      %494 = vmatpush1.msra.mxu0 0.0
      %495 = vmatprep.subr.mxu0 0.0
      %496 = vmatpush1.msra.mxu0 0.0
      %497 = vmatprep.subr.mxu0 0.0
      %498 = vmatpush1.msra.mxu0 0.0
      %499 = vmatprep.subr.mxu0 0.0
      %500 = vmatpush1.msra.mxu0 0.0
      %501 = vmatprep.subr.mxu0 0.0
      %502 = vmatpush1.msra.mxu0 0.0
      %503 = vmatprep.subr.mxu0 0.0
      %504 = vmatpush1.msra.mxu0 0.0
      %505 = vmatprep.subr.mxu0 0.0
      %506 = vmatpush1.msra.mxu0 0.0
      %507 = vmatprep.subr.mxu0 0.0
      %508 = vmatpush1.msra.mxu0 0.0
      %509 = vmatprep.subr.mxu0 0.0
      %510 = vmatpush1.msra.mxu0 0.0
      %511 = vmatprep.subr.mxu0 0.0
      %512 = vmatpush1.msra.mxu0 0.0
      %513 = vmatprep.subr.mxu0 0.0
      %514 = vmatpush1.msra.mxu0 0.0
      %515 = vmatprep.mubr.f32.mxu0 0.0
      %516 = vmatmul.mubr.f32.gmra.mrb[0].mxu0 %v427
      %v517 = vpop.f32.mrb[0].mxu0
      %v518 = vadd.f32 %v449, %v517
      %v519 = vpop.f32.mrb[0].mxu0
      %520 = vdwg.mxu0
      %521 = vst [vmem:[#allocation12] sm:$0x3] %v518
    $region57: #{tpu_custom_call.1} parent=1 // pred_fallthru
      _
    // Predicated region
    $region58: #{tpu_custom_call.1} parent=1 // pred_check
      _
    $region59: #{tpu_custom_call.1} parent=1 // pred_check_branch
      %523 = sbr.rel (0) target = $region61
    $region60: #{tpu_custom_call.1} parent=1 // pred_region
      %s525 = ssub.s32 32, 32
      %526 = vsyncadd [#allocation6], %s525
      %s528 = sshll.u32 [#allocation12], 4
      %s529 = int_to_ptr.vmem [resolvable:$true] %s528
      %531 = dma.vmem_to_hbm [thread:$0]  %s529, 32, %s7, [#allocation6]
    $region61: #{tpu_custom_call.1} parent=1 // pred_fallthru
      _
    // Predicated region
    $region62: #{tpu_custom_call.1} parent=1 // pred_check
      _
    $region63: #{tpu_custom_call.1} parent=1 // pred_check_branch
      %533 = sbr.rel (0) target = $region65
    $region64: #{tpu_custom_call.1} parent=1 // pred_region
      %534 = dma.done [#allocation6], 32
    $region65: #{tpu_custom_call.1} parent=1 // pred_fallthru
      _
    %535 = vsyncpa [#allocation5], 1
    %536 = vsyncpa [#allocation8], 1
    %537 = vsyncpa [#allocation11], 1
    %538 = vsyncpa [#allocation6], 1

</llo_original>
